<compile_context>
chip_gen: v7x
topology: tpu7x:2x2x1
jax: 0.10.0
libtpu: 0.0.40
codegen_flags: <defaults>
</compile_context>

<pallas_src>
import jax
import jax.numpy as jnp
from jax import lax
from jax.experimental import pallas as pl
from jax.experimental.pallas import tpu as pltpu


def _round_up(x: int, m: int) -> int:
    return ((x + m - 1) // m) * m


def word2vec_kernel(x_ref, w_ref, wt_ref, out_ref, hidden_ref):
    # hidden = X_tile @ W^T : contract over V (dim 1 of both operands).
    # Computed once per batch tile (first V-output iteration), kept in VMEM.
    @pl.when(pl.program_id(1) == 0)
    def _():
        hidden_ref[...] = lax.dot_general(
            x_ref[...],
            w_ref[...],
            dimension_numbers=(((1,), (1,)), ((), ())),
            preferred_element_type=jnp.float32,
        )

    # out_tile = hidden @ WT_tile^T : contract over E (dim 1 of both operands).
    out_ref[...] = lax.dot_general(
        hidden_ref[...],
        wt_ref[...],
        dimension_numbers=(((1,), (1,)), ((), ())),
        preferred_element_type=jnp.float32,
    ).astype(out_ref.dtype)


def word2vec_forward(x, w, wt, *, tb_max=256, tn_max=512):
    """x: [B, V] f32, w: [E, V] f32, wt: [V, E] f32 -> [B, V] f32."""
    B, V = x.shape
    E, Vw = w.shape
    assert Vw == V and wt.shape == (V, E)

    # Tile sizes: batch tile (sublane-aligned), output-vocab tile (lane-aligned).
    tb = min(tb_max, _round_up(B, 8))
    tn = min(tn_max, _round_up(V, 128))
    Bp = _round_up(B, tb)
    Vp = _round_up(V, tn)
    Ep = _round_up(E, 128)

    # Zero padding preserves the math exactly (padded rows/cols of W, WT are 0).
    xp = jnp.pad(x, ((0, Bp - B), (0, Vp - V)))
    wp = jnp.pad(w, ((0, Ep - E), (0, Vp - V)))
    wtp = jnp.pad(wt, ((0, Vp - V), (0, Ep - E)))

    grid = (Bp // tb, Vp // tn)

    out_p = pl.pallas_call(
        word2vec_kernel,
        out_shape=jax.ShapeDtypeStruct((Bp, Vp), jnp.float32),
        grid_spec=pltpu.PrefetchScalarGridSpec(
            num_scalar_prefetch=0,
            grid=grid,
            in_specs=[
                # X batch tile with the full (padded) V contraction axis.
                pl.BlockSpec((tb, Vp), lambda i, j: (i, 0)),
                # W stays resident (same block every iteration -> no re-DMA).
                pl.BlockSpec((Ep, Vp), lambda i, j: (0, 0)),
                # WT streamed in lane-dense (tn, Ep) output-vocab tiles.
                pl.BlockSpec((tn, Ep), lambda i, j: (j, 0)),
            ],
            out_specs=pl.BlockSpec((tb, tn), lambda i, j: (i, j)),
            scratch_shapes=[pltpu.VMEM((tb, Ep), jnp.float32)],
        ),
        compiler_params=pltpu.CompilerParams(
            dimension_semantics=("parallel", "arbitrary"),
            vmem_limit_bytes=48 * 1024 * 1024,
        ),
    )(xp, wp, wtp)

    return out_p[:B, :V]


def _run_case(key, batch, voc_size, embedding_size):
    kx, kw, kwt = jax.random.split(key, 3)

    # Deterministic stand-ins for the nn.Linear weights.
    W = jax.random.normal(kw, (embedding_size, voc_size), dtype=jnp.float32) * 0.1
    WT = jax.random.normal(kwt, (voc_size, embedding_size), dtype=jnp.float32) * 0.1

    # word2vec skip-gram input: one-hot rows of the center word.
    idx = jax.random.randint(kx, (batch,), 0, voc_size)
    X = jax.nn.one_hot(idx, voc_size, dtype=jnp.float32)

    out = jax.block_until_ready(word2vec_forward(X, W, WT))

    ref = (X @ W.T) @ WT.T
    assert out.shape == (batch, voc_size)
    assert jnp.allclose(out, ref, atol=1e-4, rtol=1e-4), (
        f"mismatch: max abs err = {jnp.max(jnp.abs(out - ref))}"
    )


if __name__ == "__main__":
    key = jax.random.PRNGKey(0)
    k1, k2 = jax.random.split(key)

    # Toy shapes consistent with the original module.
    _run_case(k1, batch=8, voc_size=32, embedding_size=16)
    # Larger, non-aligned shapes: exercises padding and multiple V-output tiles.
    _run_case(k2, batch=40, voc_size=1000, embedding_size=64)

    print("KERNEL_OK")
</pallas_src>

<mosaic_0001>
module attributes {stable_mosaic.version = 11 : i64} {
  func.func @word2vec_kernel(%arg0: i32, %arg1: i32, %arg2: memref<8x128xf32, #tpu.memory_space<vmem>>, %arg3: memref<128x128xf32, #tpu.memory_space<vmem>>, %arg4: memref<128x128xf32, #tpu.memory_space<vmem>>, %arg5: memref<8x128xf32, #tpu.memory_space<vmem>>, %arg6: memref<8x128xf32, #tpu.memory_space<vmem>>) attributes {dimension_semantics = [#tpu.dimension_semantics<parallel>, #tpu.dimension_semantics<arbitrary>], iteration_bounds = array<i64: 1, 1>, scalar_prefetch = 0 : i64, scratch_operands = 1 : i64, tpu.core_type = #tpu.core_type<tc>, window_params = [{transform_indices = @transform_0, window_bounds = array<i64: 8, 128>}, {pipeline_mode = #tpu.pipeline_mode<synchronous>, transform_indices = @transform_1, window_bounds = array<i64: 128, 128>}, {transform_indices = @transform_2, window_bounds = array<i64: 128, 128>}, {transform_indices = @transform_3, window_bounds = array<i64: 8, 128>}]} {
    %c0_i32 = arith.constant 0 : i32
    %0 = arith.cmpi eq, %arg1, %c0_i32 : i32
    %1 = arith.extui %0 : i1 to i32
    %c0_i32_0 = arith.constant 0 : i32
    %2 = arith.cmpi ne, %1, %c0_i32_0 : i32
    scf.if %2 {
      %c0_6 = arith.constant 0 : index
      %c0_7 = arith.constant 0 : index
      %7 = vector.load %arg2[%c0_6, %c0_7] : memref<8x128xf32, #tpu.memory_space<vmem>>, vector<8x128xf32>
      %c0_8 = arith.constant 0 : index
      %c0_9 = arith.constant 0 : index
      %8 = vector.load %arg3[%c0_8, %c0_9] : memref<128x128xf32, #tpu.memory_space<vmem>>, vector<128x128xf32>
      %cst_10 = arith.constant dense<0.000000e+00> : vector<8x128xf32>
      %9 = tpu.matmul %7, %8, %cst_10 {dimension_numbers = #tpu.dot_dimension_numbers<[1], [1], [0], [0], [0, 0, 1, 0], [], []>} : vector<8x128xf32>, vector<128x128xf32>, vector<8x128xf32> -> vector<8x128xf32>
      %c0_11 = arith.constant 0 : index
      %c0_12 = arith.constant 0 : index
      %10 = vector.load %arg6[%c0_11, %c0_12] : memref<8x128xf32, #tpu.memory_space<vmem>>, vector<8x128xf32>
      tpu.vector_store %arg6[%c0_11, %c0_12], %9 {strides = array<i32>} : memref<8x128xf32, #tpu.memory_space<vmem>>, vector<8x128xf32>,
    } else {
    }
    %c0 = arith.constant 0 : index
    %c0_1 = arith.constant 0 : index
    %3 = vector.load %arg6[%c0, %c0_1] : memref<8x128xf32, #tpu.memory_space<vmem>>, vector<8x128xf32>
    %c0_2 = arith.constant 0 : index
    %c0_3 = arith.constant 0 : index
    %4 = vector.load %arg4[%c0_2, %c0_3] : memref<128x128xf32, #tpu.memory_space<vmem>>, vector<128x128xf32>
    %cst = arith.constant dense<0.000000e+00> : vector<8x128xf32>
    %5 = tpu.matmul %3, %4, %cst {dimension_numbers = #tpu.dot_dimension_numbers<[1], [1], [0], [0], [0, 0, 1, 0], [], []>} : vector<8x128xf32>, vector<128x128xf32>, vector<8x128xf32> -> vector<8x128xf32>
    %c0_4 = arith.constant 0 : index
    %c0_5 = arith.constant 0 : index
    %6 = vector.load %arg5[%c0_4, %c0_5] : memref<8x128xf32, #tpu.memory_space<vmem>>, vector<8x128xf32>
    tpu.vector_store %arg5[%c0_4, %c0_5], %5 {strides = array<i32>} : memref<8x128xf32, #tpu.memory_space<vmem>>, vector<8x128xf32>,
    return
  }
  func.func @transform_0(%arg0: i32, %arg1: i32) -> (i32, i32) {
    %c0_i32 = arith.constant 0 : i32
    %c0_i32_0 = arith.constant 0 : i32
    return %arg0, %c0_i32 : i32, i32
  }
  func.func @transform_1(%arg0: i32, %arg1: i32) -> (i32, i32) {
    %c0_i32 = arith.constant 0 : i32
    %c0_i32_0 = arith.constant 0 : i32
    %c0_i32_1 = arith.constant 0 : i32
    return %c0_i32, %c0_i32_0 : i32, i32
  }
  func.func @transform_2(%arg0: i32, %arg1: i32) -> (i32, i32) {
    %c0_i32 = arith.constant 0 : i32
    %c0_i32_0 = arith.constant 0 : i32
    return %arg1, %c0_i32 : i32, i32
  }
  func.func @transform_3(%arg0: i32, %arg1: i32) -> (i32, i32) {
    %c0_i32 = arith.constant 0 : i32
    return %arg0, %arg1 : i32, i32
  }
}

</mosaic_0001>

<llo_original>
// kernel: tpu_custom_call.1
$region0: #{tpu_custom_call.1}
  #allocation0 [shape = 'u32[]', space=smem, size = 0x4, offset = 0x4, fixed_abs, tag = 'smem constant byte address 0x4 - core index']
  #allocation1 [shape = 'u32[144,128]{1,0:T(1,128)}', space=vmem, size = 0x12000, scoped, tag = 'internal scratch']
  #allocation2 [shape = 'f32[8,128]{1,0:T(8,128)}', space=vmem, size = 0x1000, scoped, tag = 'scratch operand']
  %s0 = inlined_call_operand.hbm [shape: f32[8,128], index: 0, kind: input, shape index: {}]
  %s1 = inlined_call_operand.hbm [shape: f32[128,128], index: 1, kind: input, shape index: {}]
  %s2 = inlined_call_operand.hbm [shape: f32[128,128], index: 2, kind: input, shape index: {}]
  %s3 = inlined_call_operand.hbm [shape: f32[8,128], index: 3, kind: output, shape index: {}]
  %s4 = sld [smem:[#allocation0]]
  $region38: #{tpu_custom_call.1} parent=0
    _
  %s6 = ssub.s32 1, %s4
  %s7 = scalar_select 0, %s6, %s4
  $region1: #{tpu_custom_call.1} parent=0
    #allocation3 [shape = 'u8[4096]{0}', space=vmem, size = 0x1000, scoped, tag = 'input window, operand 0, single buffered']
    #allocation4 [shape = 's32[1]{0}', space=sflag, size = 0x4, scoped, tag = 'scoped memory for tpu_custom_call.1']
    #allocation5 [shape = 's32[1]{0}', space=sflag, size = 0x4, scoped, tag = 'scoped memory for tpu_custom_call.1']
    #allocation6 [shape = 'u8[65536]{0}', space=vmem, size = 0x10000, scoped, tag = 'input window, operand 1, single buffered']
    #allocation7 [shape = 's32[1]{0}', space=sflag, size = 0x4, scoped, tag = 'scoped memory for tpu_custom_call.1']
    #allocation8 [shape = 'u8[65536]{0}', space=vmem, size = 0x10000, scoped, tag = 'input window, operand 2, single buffered']
    #allocation9 [shape = 'u8[4096]{0}', space=vmem, size = 0x1000, scoped, tag = 'output window, operand 0, single buffered']
    %8 = vsyncpa [#allocation4], 0
    %9 = vsyncpa [#allocation7], 0
    %10 = vsyncpa [#allocation5], 0
    // Predicated region
    $region2: #{tpu_custom_call.1} parent=1 // pred_check
      _
    $region3: #{tpu_custom_call.1} parent=1 // pred_check_branch
      %12 = sbr.rel (0) target = $region5
    $region4: #{tpu_custom_call.1} parent=1 // pred_region
      %s14 = ssub.s32 128, 128
      %15 = vsyncadd [#allocation4], %s14
      %s17 = sshll.u32 [#allocation3], 4
      %s18 = int_to_ptr.vmem [resolvable:$true] %s17
      %20 = dma.hbm_to_vmem [thread:$0]  %s0, 128, %s18, [#allocation4]
    $region5: #{tpu_custom_call.1} parent=1 // pred_fallthru
      _
    // Predicated region
    $region6: #{tpu_custom_call.1} parent=1 // pred_check
      _
    $region7: #{tpu_custom_call.1} parent=1 // pred_check_branch
      %22 = sbr.rel (0) target = $region9
    $region8: #{tpu_custom_call.1} parent=1 // pred_region
      %s24 = ssub.s32 2048, 2048
      %25 = vsyncadd [#allocation7], %s24
      %s26 = sshll.u32 [#allocation6], 4
      %s27 = int_to_ptr.vmem [resolvable:$true] %s26
      %32 = dma.hbm_to_vmem [thread:$0]  %s1, 2048, %s27, [#allocation7], 128, 128, 8
    $region9: #{tpu_custom_call.1} parent=1 // pred_fallthru
      _
    // Predicated region
    $region10: #{tpu_custom_call.1} parent=1 // pred_check
      _
    $region11: #{tpu_custom_call.1} parent=1 // pred_check_branch
      %34 = sbr.rel (0) target = $region13
    $region12: #{tpu_custom_call.1} parent=1 // pred_region
      %s36 = ssub.s32 2048, 2048
      %37 = vsyncadd [#allocation7], %s36
      %s38 = sshll.u32 [#allocation8], 4
      %s39 = int_to_ptr.vmem [resolvable:$true] %s38
      %44 = dma.hbm_to_vmem [thread:$0]  %s2, 2048, %s39, [#allocation7], 128, 128, 8
    $region13: #{tpu_custom_call.1} parent=1 // pred_fallthru
      _
    // Predicated region
    $region14: #{tpu_custom_call.1} parent=1 // pred_check
      _
    $region15: #{tpu_custom_call.1} parent=1 // pred_check_branch
      %46 = sbr.rel (0) target = $region17
    $region16: #{tpu_custom_call.1} parent=1 // pred_region
      %47 = dma.done [#allocation4], 128
    $region17: #{tpu_custom_call.1} parent=1 // pred_fallthru
      _
    // Predicated region
    $region18: #{tpu_custom_call.1} parent=1 // pred_check
      _
    $region19: #{tpu_custom_call.1} parent=1 // pred_check_branch
      %49 = sbr.rel (0) target = $region21
    $region20: #{tpu_custom_call.1} parent=1 // pred_region
      %50 = dma.done [#allocation7], 2048
    $region21: #{tpu_custom_call.1} parent=1 // pred_fallthru
      _
    // Predicated region
    $region22: #{tpu_custom_call.1} parent=1 // pred_check
      _
    $region23: #{tpu_custom_call.1} parent=1 // pred_check_branch
      %52 = sbr.rel (0) target = $region25
    $region24: #{tpu_custom_call.1} parent=1 // pred_region
      %53 = dma.done [#allocation7], 2048
    $region25: #{tpu_custom_call.1} parent=1 // pred_fallthru
      _
    %p54 = scmp.eq.s32.totalorder 0, 0
    // Predicated region
    $region26: #{tpu_custom_call.1} parent=1 // pred_check
      %p55 = pneg %p54
    $region27: #{tpu_custom_call.1} parent=1 // pred_check_branch
      %57 = sbr.rel (%p55) target = $region29
    $region28: #{tpu_custom_call.1} parent=1 // pred_region
      %v58 = vld [vmem:[#allocation3] sm:$0xff]
      %v59 = vld [vmem:[#allocation6] sm:$0xff]
      %v60 = vld [vmem:[#allocation6 + $0x8] sm:$0xff]
      %v61 = vld [vmem:[#allocation6 + $0x10] sm:$0xff]
      %v62 = vld [vmem:[#allocation6 + $0x18] sm:$0xff]
      %v63 = vld [vmem:[#allocation6 + $0x20] sm:$0xff]
      %v64 = vld [vmem:[#allocation6 + $0x28] sm:$0xff]
      %v65 = vld [vmem:[#allocation6 + $0x30] sm:$0xff]
      %v66 = vld [vmem:[#allocation6 + $0x38] sm:$0xff]
      %v67 = vld [vmem:[#allocation6 + $0x40] sm:$0xff]
      %v68 = vld [vmem:[#allocation6 + $0x48] sm:$0xff]
      %v69 = vld [vmem:[#allocation6 + $0x50] sm:$0xff]
      %v70 = vld [vmem:[#allocation6 + $0x58] sm:$0xff]
      %v71 = vld [vmem:[#allocation6 + $0x60] sm:$0xff]
      %v72 = vld [vmem:[#allocation6 + $0x68] sm:$0xff]
      %v73 = vld [vmem:[#allocation6 + $0x70] sm:$0xff]
      %v74 = vld [vmem:[#allocation6 + $0x78] sm:$0xff]
      %75 = vmatprep.subr.mxu0 0.0
      %76 = vmatpush1.xpose.msra.mxu0 %v59
      %77 = vmatprep.subr.mxu0 0.0
      %78 = vmatpush1.xpose.msra.mxu0 %v60
      %79 = vmatprep.subr.mxu0 0.0
      %80 = vmatpush1.xpose.msra.mxu0 %v61
      %81 = vmatprep.subr.mxu0 0.0
      %82 = vmatpush1.xpose.msra.mxu0 %v62
      %83 = vmatprep.subr.mxu0 0.0
      %84 = vmatpush1.xpose.msra.mxu0 %v63
      %85 = vmatprep.subr.mxu0 0.0
      %86 = vmatpush1.xpose.msra.mxu0 %v64
      %87 = vmatprep.subr.mxu0 0.0
      %88 = vmatpush1.xpose.msra.mxu0 %v65
      %89 = vmatprep.subr.mxu0 0.0
      %90 = vmatpush1.xpose.msra.mxu0 %v66
      %91 = vmatprep.subr.mxu0 0.0
      %92 = vmatpush1.xpose.msra.mxu0 %v67
      %93 = vmatprep.subr.mxu0 0.0
      %94 = vmatpush1.xpose.msra.mxu0 %v68
      %95 = vmatprep.subr.mxu0 0.0
      %96 = vmatpush1.xpose.msra.mxu0 %v69
      %97 = vmatprep.subr.mxu0 0.0
      %98 = vmatpush1.xpose.msra.mxu0 %v70
      %99 = vmatprep.subr.mxu0 0.0
      %100 = vmatpush1.xpose.msra.mxu0 %v71
      %101 = vmatprep.subr.mxu0 0.0
      %102 = vmatpush1.xpose.msra.mxu0 %v72
      %103 = vmatprep.subr.mxu0 0.0
      %104 = vmatpush1.xpose.msra.mxu0 %v73
      %105 = vmatprep.subr.mxu0 0.0
      %106 = vmatpush1.xpose.msra.mxu0 %v74
      %107 = vmatprep.subr.mxu0 0.0
      %108 = vmatpush1.xpose.msra.mxu0 0.0
      %109 = vmatprep.subr.mxu0 0.0
      %110 = vmatpush1.xpose.msra.mxu0 0.0
      %111 = vmatprep.subr.mxu0 0.0
      %112 = vmatpush1.xpose.msra.mxu0 0.0
      %113 = vmatprep.subr.mxu0 0.0
      %114 = vmatpush1.xpose.msra.mxu0 0.0
      %115 = vmatprep.subr.mxu0 0.0
      %116 = vmatpush1.xpose.msra.mxu0 0.0
      %117 = vmatprep.subr.mxu0 0.0
      %118 = vmatpush1.xpose.msra.mxu0 0.0
      %119 = vmatprep.subr.mxu0 0.0
      %120 = vmatpush1.xpose.msra.mxu0 0.0
      %121 = vmatprep.subr.mxu0 0.0
      %122 = vmatpush1.xpose.msra.mxu0 0.0
      %123 = vmatprep.subr.mxu0 0.0
      %124 = vmatpush1.xpose.msra.mxu0 0.0
      %125 = vmatprep.subr.mxu0 0.0
      %126 = vmatpush1.xpose.msra.mxu0 0.0
      %127 = vmatprep.subr.mxu0 0.0
      %128 = vmatpush1.xpose.msra.mxu0 0.0
      %129 = vmatprep.subr.mxu0 0.0
      %130 = vmatpush1.xpose.msra.mxu0 0.0
      %131 = vmatprep.subr.mxu0 0.0
      %132 = vmatpush1.xpose.msra.mxu0 0.0
      %133 = vmatprep.subr.mxu0 0.0
      %134 = vmatpush1.xpose.msra.mxu0 0.0
      %135 = vmatprep.subr.mxu0 0.0
      %136 = vmatpush1.xpose.msra.mxu0 0.0
      %137 = vmatprep.subr.mxu0 0.0
      %138 = vmatpush1.xpose.msra.mxu0 0.0
      %139 = vmatprep.mubr.f32.mxu0 0.0
      %140 = vmatmul.mubr.f32.gmra.mrb[0].mxu0 %v58
      %v141 = vpop.f32.mrb[0].mxu0
      %v142 = vadd.f32 0.0, %v141
      %v143 = vpop.f32.mrb[0].mxu0
      %144 = vdwg.mxu0
      %145 = vst [vmem:[#allocation2] sm:$0xff] %v142
    $region29: #{tpu_custom_call.1} parent=1 // pred_fallthru
      _
    %v146 = vld [vmem:[#allocation2] sm:$0xff]
    %v147 = vld [vmem:[#allocation8] sm:$0xff]
    %v148 = vld [vmem:[#allocation8 + $0x8] sm:$0xff]
    %v149 = vld [vmem:[#allocation8 + $0x10] sm:$0xff]
    %v150 = vld [vmem:[#allocation8 + $0x18] sm:$0xff]
    %v151 = vld [vmem:[#allocation8 + $0x20] sm:$0xff]
    %v152 = vld [vmem:[#allocation8 + $0x28] sm:$0xff]
    %v153 = vld [vmem:[#allocation8 + $0x30] sm:$0xff]
    %v154 = vld [vmem:[#allocation8 + $0x38] sm:$0xff]
    %v155 = vld [vmem:[#allocation8 + $0x40] sm:$0xff]
    %v156 = vld [vmem:[#allocation8 + $0x48] sm:$0xff]
    %v157 = vld [vmem:[#allocation8 + $0x50] sm:$0xff]
    %v158 = vld [vmem:[#allocation8 + $0x58] sm:$0xff]
    %v159 = vld [vmem:[#allocation8 + $0x60] sm:$0xff]
    %v160 = vld [vmem:[#allocation8 + $0x68] sm:$0xff]
    %v161 = vld [vmem:[#allocation8 + $0x70] sm:$0xff]
    %v162 = vld [vmem:[#allocation8 + $0x78] sm:$0xff]
    %163 = vmatprep.subr.mxu0 0.0
    %164 = vmatpush1.xpose.msra.mxu0 %v147
    %165 = vmatprep.subr.mxu0 0.0
    %166 = vmatpush1.xpose.msra.mxu0 %v148
    %167 = vmatprep.subr.mxu0 0.0
    %168 = vmatpush1.xpose.msra.mxu0 %v149
    %169 = vmatprep.subr.mxu0 0.0
    %170 = vmatpush1.xpose.msra.mxu0 %v150
    %171 = vmatprep.subr.mxu0 0.0
    %172 = vmatpush1.xpose.msra.mxu0 %v151
    %173 = vmatprep.subr.mxu0 0.0
    %174 = vmatpush1.xpose.msra.mxu0 %v152
    %175 = vmatprep.subr.mxu0 0.0
    %176 = vmatpush1.xpose.msra.mxu0 %v153
    %177 = vmatprep.subr.mxu0 0.0
    %178 = vmatpush1.xpose.msra.mxu0 %v154
    %179 = vmatprep.subr.mxu0 0.0
    %180 = vmatpush1.xpose.msra.mxu0 %v155
    %181 = vmatprep.subr.mxu0 0.0
    %182 = vmatpush1.xpose.msra.mxu0 %v156
    %183 = vmatprep.subr.mxu0 0.0
    %184 = vmatpush1.xpose.msra.mxu0 %v157
    %185 = vmatprep.subr.mxu0 0.0
    %186 = vmatpush1.xpose.msra.mxu0 %v158
    %187 = vmatprep.subr.mxu0 0.0
    %188 = vmatpush1.xpose.msra.mxu0 %v159
    %189 = vmatprep.subr.mxu0 0.0
    %190 = vmatpush1.xpose.msra.mxu0 %v160
    %191 = vmatprep.subr.mxu0 0.0
    %192 = vmatpush1.xpose.msra.mxu0 %v161
    %193 = vmatprep.subr.mxu0 0.0
    %194 = vmatpush1.xpose.msra.mxu0 %v162
    %195 = vmatprep.subr.mxu0 0.0
    %196 = vmatpush1.xpose.msra.mxu0 0.0
    %197 = vmatprep.subr.mxu0 0.0
    %198 = vmatpush1.xpose.msra.mxu0 0.0
    %199 = vmatprep.subr.mxu0 0.0
    %200 = vmatpush1.xpose.msra.mxu0 0.0
    %201 = vmatprep.subr.mxu0 0.0
    %202 = vmatpush1.xpose.msra.mxu0 0.0
    %203 = vmatprep.subr.mxu0 0.0
    %204 = vmatpush1.xpose.msra.mxu0 0.0
    %205 = vmatprep.subr.mxu0 0.0
    %206 = vmatpush1.xpose.msra.mxu0 0.0
    %207 = vmatprep.subr.mxu0 0.0
    %208 = vmatpush1.xpose.msra.mxu0 0.0
    %209 = vmatprep.subr.mxu0 0.0
    %210 = vmatpush1.xpose.msra.mxu0 0.0
    %211 = vmatprep.subr.mxu0 0.0
    %212 = vmatpush1.xpose.msra.mxu0 0.0
    %213 = vmatprep.subr.mxu0 0.0
    %214 = vmatpush1.xpose.msra.mxu0 0.0
    %215 = vmatprep.subr.mxu0 0.0
    %216 = vmatpush1.xpose.msra.mxu0 0.0
    %217 = vmatprep.subr.mxu0 0.0
    %218 = vmatpush1.xpose.msra.mxu0 0.0
    %219 = vmatprep.subr.mxu0 0.0
    %220 = vmatpush1.xpose.msra.mxu0 0.0
    %221 = vmatprep.subr.mxu0 0.0
    %222 = vmatpush1.xpose.msra.mxu0 0.0
    %223 = vmatprep.subr.mxu0 0.0
    %224 = vmatpush1.xpose.msra.mxu0 0.0
    %225 = vmatprep.subr.mxu0 0.0
    %226 = vmatpush1.xpose.msra.mxu0 0.0
    %227 = vmatprep.mubr.f32.mxu0 0.0
    %228 = vmatmul.mubr.f32.gmra.mrb[0].mxu0 %v146
    %v229 = vpop.f32.mrb[0].mxu0
    %v230 = vadd.f32 0.0, %v229
    %v231 = vpop.f32.mrb[0].mxu0
    %232 = vdwg.mxu0
    %233 = vst [vmem:[#allocation9] sm:$0xff] %v230
    // Predicated region
    $region30: #{tpu_custom_call.1} parent=1 // pred_check
      _
    $region31: #{tpu_custom_call.1} parent=1 // pred_check_branch
      %235 = sbr.rel (0) target = $region33
    $region32: #{tpu_custom_call.1} parent=1 // pred_region
      %s237 = ssub.s32 128, 128
      %238 = vsyncadd [#allocation5], %s237
      %s240 = sshll.u32 [#allocation9], 4
      %s241 = int_to_ptr.vmem [resolvable:$true] %s240
      %243 = dma.vmem_to_hbm [thread:$0]  %s241, 128, %s3, [#allocation5]
    $region33: #{tpu_custom_call.1} parent=1 // pred_fallthru
      _
    // Predicated region
    $region34: #{tpu_custom_call.1} parent=1 // pred_check
      _
    $region35: #{tpu_custom_call.1} parent=1 // pred_check_branch
      %245 = sbr.rel (0) target = $region37
    $region36: #{tpu_custom_call.1} parent=1 // pred_region
      %246 = dma.done [#allocation5], 128
    $region37: #{tpu_custom_call.1} parent=1 // pred_fallthru
      _
    %247 = vsyncpa [#allocation4], 1
    %248 = vsyncpa [#allocation7], 1
    %249 = vsyncpa [#allocation5], 1

</llo_original>
